<compile_context>
chip_gen: v5e
topology: v5e:2x2
jax: 0.10.0
libtpu: 0.0.40
codegen_flags: <defaults>
</compile_context>

<pallas_src>
import jax
import jax.numpy as jnp
from jax.experimental import pallas as pl
from jax.experimental.pallas import tpu as pltpu


def _round_up(x, m):
    return (x + m - 1) // m * m


def _ffn_kernel(x_ref, w1_ref, b1_ref, w2_ref, b2_ref, o_ref, acc_ref):
    # x_ref:  (tm, d_model_pad)   w1_ref: (d_model_pad, th)   b1_ref: (num_k, th)
    # w2_ref: (th, tn)            b2_ref: (1, tn)             o_ref:  (tm, tn)
    # acc_ref: (tm, tn) f32 scratch, resident across the hidden (k) axis.
    k = pl.program_id(2)

    # First matmul for this hidden tile; bias + ReLU in f32.
    h = jnp.dot(x_ref[...], w1_ref[...], preferred_element_type=jnp.float32)
    b1 = b1_ref[pl.ds(k, 1), :].astype(jnp.float32)          # (1, th), resident b1
    h = jnp.maximum(h + b1, 0.0)
    # dropout: identity (eval mode)

    # Second matmul: this hidden tile's contribution, accumulated in f32.
    contrib = jnp.dot(h.astype(w2_ref.dtype), w2_ref[...],
                      preferred_element_type=jnp.float32)

    @pl.when(k == 0)
    def _():
        acc_ref[...] = contrib            # write on first k: no zero store + re-read

    @pl.when(k > 0)
    def _():
        acc_ref[...] += contrib

    @pl.when(k == pl.num_programs(2) - 1)
    def _():
        o_ref[...] = (acc_ref[...] + b2_ref[...].astype(jnp.float32)).astype(o_ref.dtype)


def _vmem_info():
    try:
        info = pltpu.get_tpu_info()
        cap = int(getattr(info, "vmem_capacity_bytes", 0)) or (128 << 20)
    except Exception:
        cap = 128 << 20
    budget = max(int(cap * 0.75), 32 << 20)     # ~96 MiB on v5e/v6e, ~48 MiB on v7x
    two_core = cap <= (64 << 20)                # v7x-like: small VMEM, 2 TCs/chip
    return budget, two_core


def _select_tiles(M, d_model, hidden, comp_bytes, out_bytes, budget, two_core,
                  tm=512, th=512):
    dmp0 = _round_up(d_model, 128)
    hp0 = _round_up(hidden, 128)
    tm = min(tm, _round_up(M, 8))
    th = min(th, hp0)
    tn = dmp0

    def estimate(tm, th, tn):
        dmp = _round_up(dmp0, tn)
        hp = _round_up(hp0, th)
        x_t = tm * dmp * comp_bytes
        w1_t = dmp * th * comp_bytes
        w2_t = th * tn * comp_bytes
        b1_t = _round_up(hp // th, 8) * th * 4          # resident b1 (sublane-padded)
        b2_t = 8 * tn * 4
        o_t = tm * tn * out_bytes
        acc = tm * tn * 4
        h_scr = tm * th * (4 + comp_bytes)              # materialized h + its cast
        return 2 * (x_t + w1_t + w2_t + b2_t + o_t) + 2 * b1_t + acc + h_scr

    def _halve(v, align, floor):
        return max(floor, max(align, (v // 2) // align * align))

    # Shrink order (cheapest perf cost first): th -> tn -> tm.  th only adds
    # VMEM-local accumulator round trips; tn re-streams W1 per n block; tm
    # directly reduces weight reuse (the HBM weight-stream bottleneck).
    for which, floor in (("th", 256), ("tn", 1024), ("th", 128), ("tn", 512),
                         ("tm", 256), ("tn", 128), ("tm", 8)):
        while estimate(tm, th, tn) > budget:
            if which == "th":
                if th <= floor:
                    break
                th = _halve(th, 128, floor)
            elif which == "tn":
                if tn <= floor:
                    break
                tn = _halve(tn, 128, floor)
            else:
                if tm <= floor:
                    break
                tm = _halve(tm, 8, floor)

    # On 2-TensorCore chips make sure the "parallel" row axis has >= 2 blocks.
    if two_core:
        while _round_up(M, tm) // tm < 2 and tm > 8:
            tm = _halve(tm, 8, 8)

    return tm, th, tn


def positionwise_feed_forward(x, w1, b1, w2, b2, *, tm=512, th=512,
                              compute_dtype=None):
    """x: (batch, seq, d_model) -> (batch, seq, d_model).  Eval-mode FFN."""
    batch, seq, d_model = x.shape
    hidden = w1.shape[1]
    M = batch * seq

    out_dtype = x.dtype
    # Pass compute_dtype=jnp.bfloat16 for full MXU throughput on v6e/v7x
    # (accumulation stays f32).  Default keeps input dtype for exact semantics.
    comp_dtype = jnp.dtype(compute_dtype) if compute_dtype is not None else jnp.dtype(x.dtype)

    budget, two_core = _vmem_info()
    tm_eff, th_eff, tn_eff = _select_tiles(
        M, d_model, hidden, comp_dtype.itemsize, jnp.dtype(out_dtype).itemsize,
        budget, two_core, tm=tm, th=th)

    d_model_pad = _round_up(_round_up(d_model, 128), tn_eff)
    hidden_pad = _round_up(_round_up(hidden, 128), th_eff)
    M_pad = _round_up(M, tm_eff)
    num_k = hidden_pad // th_eff

    # Zero padding is an exact no-op for this FFN: padded hidden columns see
    # zero b1 / zero W2 rows, padded d_model columns are sliced off at the end.
    x2d = jnp.pad(x.reshape(M, d_model),
                  ((0, M_pad - M), (0, d_model_pad - d_model))).astype(comp_dtype)
    w1p = jnp.pad(w1, ((0, d_model_pad - d_model),
                       (0, hidden_pad - hidden))).astype(comp_dtype)
    w2p = jnp.pad(w2, ((0, hidden_pad - hidden),
                       (0, d_model_pad - d_model))).astype(comp_dtype)
    b1r = jnp.pad(b1, (0, hidden_pad - hidden)).reshape(num_k, th_eff)
    b2r = jnp.pad(b2, (0, d_model_pad - d_model)).reshape(1, d_model_pad)

    grid = (M_pad // tm_eff, d_model_pad // tn_eff, num_k)

    out2d = pl.pallas_call(
        _ffn_kernel,
        out_shape=jax.ShapeDtypeStruct((M_pad, d_model_pad), out_dtype),
        grid_spec=pltpu.PrefetchScalarGridSpec(
            num_scalar_prefetch=0,
            grid=grid,
            in_specs=[
                pl.BlockSpec((tm_eff, d_model_pad), lambda i, n, k: (i, 0)),   # x rows
                pl.BlockSpec((d_model_pad, th_eff), lambda i, n, k: (0, k)),   # W1 cols
                pl.BlockSpec((num_k, th_eff), lambda i, n, k: (0, 0)),         # b1 (resident)
                pl.BlockSpec((th_eff, tn_eff), lambda i, n, k: (k, n)),        # W2 tile
                pl.BlockSpec((1, tn_eff), lambda i, n, k: (0, n)),             # b2
            ],
            out_specs=pl.BlockSpec((tm_eff, tn_eff), lambda i, n, k: (i, n)),
            scratch_shapes=[pltpu.VMEM((tm_eff, tn_eff), jnp.float32)],
        ),
        compiler_params=pltpu.CompilerParams(
            dimension_semantics=("parallel", "parallel", "arbitrary"),
            vmem_limit_bytes=budget,
        ),
    )(x2d, w1p, b1r, w2p, b2r)

    return out2d[:M, :d_model].reshape(batch, seq, d_model)


def _init_params(key, d_model, hidden, dtype=jnp.float32):
    # Deterministic init mimicking nn.Linear's uniform(-1/sqrt(fan_in), 1/sqrt(fan_in)).
    k1, k2, k3, k4 = jax.random.split(key, 4)
    bound1 = 1.0 / jnp.sqrt(d_model)
    bound2 = 1.0 / jnp.sqrt(hidden)
    w1 = jax.random.uniform(k1, (d_model, hidden), dtype, -bound1, bound1)
    b1 = jax.random.uniform(k2, (hidden,), dtype, -bound1, bound1)
    w2 = jax.random.uniform(k3, (hidden, d_model), dtype, -bound2, bound2)
    b2 = jax.random.uniform(k4, (d_model,), dtype, -bound2, bound2)
    return w1, b1, w2, b2


if __name__ == "__main__":
    batch, seq, d_model, hidden = 2, 8, 32, 64
    key = jax.random.PRNGKey(0)
    kx, kp = jax.random.split(key)

    x = jax.random.normal(kx, (batch, seq, d_model), jnp.float32)
    w1, b1, w2, b2 = _init_params(kp, d_model, hidden)

    out = positionwise_feed_forward(x, w1, b1, w2, b2)
    out = jax.block_until_ready(out)

    # Reference check (pure JAX) — same semantics as the PyTorch module in eval mode.
    ref = jnp.maximum(x @ w1 + b1, 0.0) @ w2 + b2
    assert out.shape == (batch, seq, d_model)
    assert jnp.allclose(out, ref, atol=1e-5, rtol=1e-5)

    print("KERNEL_OK")
</pallas_src>

<mosaic_0001>
module attributes {stable_mosaic.version = 11 : i64} {
  func.func @_ffn_kernel(%arg0: i32, %arg1: i32, %arg2: i32, %arg3: memref<16x128xf32, #tpu.memory_space<vmem>>, %arg4: memref<128x128xf32, #tpu.memory_space<vmem>>, %arg5: memref<1x128xf32, #tpu.memory_space<vmem>>, %arg6: memref<128x128xf32, #tpu.memory_space<vmem>>, %arg7: memref<1x128xf32, #tpu.memory_space<vmem>>, %arg8: memref<16x128xf32, #tpu.memory_space<vmem>>, %arg9: memref<16x128xf32, #tpu.memory_space<vmem>>) attributes {dimension_semantics = [#tpu.dimension_semantics<parallel>, #tpu.dimension_semantics<parallel>, #tpu.dimension_semantics<arbitrary>], iteration_bounds = array<i64: 1, 1, 1>, scalar_prefetch = 0 : i64, scratch_operands = 1 : i64, tpu.core_type = #tpu.core_type<tc>, window_params = [{transform_indices = @transform_0, window_bounds = array<i64: 16, 128>}, {transform_indices = @transform_1, window_bounds = array<i64: 128, 128>}, {pipeline_mode = #tpu.pipeline_mode<synchronous>, transform_indices = @transform_2, window_bounds = array<i64: 1, 128>}, {transform_indices = @transform_3, window_bounds = array<i64: 128, 128>}, {transform_indices = @transform_4, window_bounds = array<i64: 1, 128>}, {transform_indices = @transform_5, window_bounds = array<i64: 16, 128>}]} {
    %c0 = arith.constant 0 : index
    %c0_0 = arith.constant 0 : index
    %0 = vector.load %arg3[%c0, %c0_0] : memref<16x128xf32, #tpu.memory_space<vmem>>, vector<16x128xf32>
    %c0_1 = arith.constant 0 : index
    %c0_2 = arith.constant 0 : index
    %1 = vector.load %arg4[%c0_1, %c0_2] : memref<128x128xf32, #tpu.memory_space<vmem>>, vector<128x128xf32>
    %cst = arith.constant dense<0.000000e+00> : vector<16x128xf32>
    %2 = tpu.matmul %0, %1, %cst {dimension_numbers = #tpu.dot_dimension_numbers<[1], [0], [0], [1], [0, 0, 1, 1], [], []>} : vector<16x128xf32>, vector<128x128xf32>, vector<16x128xf32> -> vector<16x128xf32>
    %3 = arith.index_cast %arg2 : i32 to index
    %c0_3 = arith.constant 0 : index
    %4 = vector.load %arg5[%3, %c0_3] : memref<1x128xf32, #tpu.memory_space<vmem>>, vector<1x128xf32>
    %5 = vector.broadcast %4 : vector<1x128xf32> to vector<16x128xf32>
    %6 = arith.addf %2, %5 : vector<16x128xf32>
    %cst_4 = arith.constant 0.000000e+00 : f32
    %7 = vector.broadcast %cst_4 : f32 to vector<16x128xf32>
    %8 = arith.maximumf %6, %7 : vector<16x128xf32>
    %c0_5 = arith.constant 0 : index
    %c0_6 = arith.constant 0 : index
    %9 = vector.load %arg6[%c0_5, %c0_6] : memref<128x128xf32, #tpu.memory_space<vmem>>, vector<128x128xf32>
    %cst_7 = arith.constant dense<0.000000e+00> : vector<16x128xf32>
    %10 = tpu.matmul %8, %9, %cst_7 {dimension_numbers = #tpu.dot_dimension_numbers<[1], [0], [0], [1], [0, 0, 1, 1], [], []>} : vector<16x128xf32>, vector<128x128xf32>, vector<16x128xf32> -> vector<16x128xf32>
    %c0_i32 = arith.constant 0 : i32
    %11 = arith.cmpi eq, %arg2, %c0_i32 : i32
    %12 = arith.extui %11 : i1 to i32
    %c0_i32_8 = arith.constant 0 : i32
    %13 = arith.cmpi ne, %12, %c0_i32_8 : i32
    scf.if %13 {
      %c0_13 = arith.constant 0 : index
      %c0_14 = arith.constant 0 : index
      %20 = vector.load %arg9[%c0_13, %c0_14] : memref<16x128xf32, #tpu.memory_space<vmem>>, vector<16x128xf32>
      tpu.vector_store %arg9[%c0_13, %c0_14], %10 {strides = array<i32>} : memref<16x128xf32, #tpu.memory_space<vmem>>, vector<16x128xf32>,
    } else {
    }
    %c0_i32_9 = arith.constant 0 : i32
    %14 = arith.cmpi sgt, %arg2, %c0_i32_9 : i32
    %15 = arith.extui %14 : i1 to i32
    %c0_i32_10 = arith.constant 0 : i32
    %16 = arith.cmpi ne, %15, %c0_i32_10 : i32
    scf.if %16 {
      %c0_13 = arith.constant 0 : index
      %c0_14 = arith.constant 0 : index
      %20 = vector.load %arg9[%c0_13, %c0_14] : memref<16x128xf32, #tpu.memory_space<vmem>>, vector<16x128xf32>
      %21 = arith.addf %20, %10 : vector<16x128xf32>
      %c0_15 = arith.constant 0 : index
      %c0_16 = arith.constant 0 : index
      %22 = vector.load %arg9[%c0_15, %c0_16] : memref<16x128xf32, #tpu.memory_space<vmem>>, vector<16x128xf32>
      tpu.vector_store %arg9[%c0_15, %c0_16], %21 {strides = array<i32>} : memref<16x128xf32, #tpu.memory_space<vmem>>, vector<16x128xf32>,
    } else {
    }
    %c0_i32_11 = arith.constant 0 : i32
    %17 = arith.cmpi eq, %arg2, %c0_i32_11 : i32
    %18 = arith.extui %17 : i1 to i32
    %c0_i32_12 = arith.constant 0 : i32
    %19 = arith.cmpi ne, %18, %c0_i32_12 : i32
    scf.if %19 {
      %c0_13 = arith.constant 0 : index
      %c0_14 = arith.constant 0 : index
      %20 = vector.load %arg9[%c0_13, %c0_14] : memref<16x128xf32, #tpu.memory_space<vmem>>, vector<16x128xf32>
      %c0_15 = arith.constant 0 : index
      %c0_16 = arith.constant 0 : index
      %21 = vector.load %arg7[%c0_15, %c0_16] : memref<1x128xf32, #tpu.memory_space<vmem>>, vector<1x128xf32>
      %22 = vector.broadcast %21 : vector<1x128xf32> to vector<16x128xf32>
      %23 = arith.addf %20, %22 : vector<16x128xf32>
      %c0_17 = arith.constant 0 : index
      %c0_18 = arith.constant 0 : index
      %24 = vector.load %arg8[%c0_17, %c0_18] : memref<16x128xf32, #tpu.memory_space<vmem>>, vector<16x128xf32>
      tpu.vector_store %arg8[%c0_17, %c0_18], %23 {strides = array<i32>} : memref<16x128xf32, #tpu.memory_space<vmem>>, vector<16x128xf32>,
    } else {
    }
    return
  }
  func.func @transform_0(%arg0: i32, %arg1: i32, %arg2: i32) -> (i32, i32) {
    %c0_i32 = arith.constant 0 : i32
    %c0_i32_0 = arith.constant 0 : i32
    return %arg0, %c0_i32 : i32, i32
  }
  func.func @transform_1(%arg0: i32, %arg1: i32, %arg2: i32) -> (i32, i32) {
    %c0_i32 = arith.constant 0 : i32
    %c0_i32_0 = arith.constant 0 : i32
    return %c0_i32, %arg2 : i32, i32
  }
  func.func @transform_2(%arg0: i32, %arg1: i32, %arg2: i32) -> (i32, i32) {
    %c0_i32 = arith.constant 0 : i32
    %c0_i32_0 = arith.constant 0 : i32
    %c0_i32_1 = arith.constant 0 : i32
    return %c0_i32, %c0_i32_0 : i32, i32
  }
  func.func @transform_3(%arg0: i32, %arg1: i32, %arg2: i32) -> (i32, i32) {
    %c0_i32 = arith.constant 0 : i32
    return %arg2, %arg1 : i32, i32
  }
  func.func @transform_4(%arg0: i32, %arg1: i32, %arg2: i32) -> (i32, i32) {
    %c0_i32 = arith.constant 0 : i32
    %c0_i32_0 = arith.constant 0 : i32
    return %c0_i32, %arg1 : i32, i32
  }
  func.func @transform_5(%arg0: i32, %arg1: i32, %arg2: i32) -> (i32, i32) {
    %c0_i32 = arith.constant 0 : i32
    return %arg0, %arg1 : i32, i32
  }
}

</mosaic_0001>

<llo_original>
// kernel: tpu_custom_call.1
$region0: #{tpu_custom_call.1}
  #allocation0 [shape = 'u32[]', space=smem, size = 0x4, offset = 0x4, fixed_abs, tag = 'smem constant byte address 0x4 - core index']
  #allocation1 [shape = 'u32[72,128]{1,0:T(1,128)}', space=vmem, size = 0x9000, scoped, tag = 'internal scratch']
  #allocation2 [shape = 'f32[16,128]{1,0:T(8,128)}', space=vmem, size = 0x2000, scoped, tag = 'scratch operand']
  %s0 = inlined_call_operand.hbm [shape: f32[16,128], index: 0, kind: input, shape index: {}]
  %s1 = inlined_call_operand.hbm [shape: f32[128,128], index: 1, kind: input, shape index: {}]
  %s2 = inlined_call_operand.vmem [shape: f32[1,128], index: 2, kind: input, shape index: {}]
  %s3 = inlined_call_operand.hbm [shape: f32[128,128], index: 3, kind: input, shape index: {}]
  %s4 = inlined_call_operand.vmem [shape: f32[1,128], index: 4, kind: input, shape index: {}]
  %s5 = inlined_call_operand.hbm [shape: f32[16,128], index: 5, kind: output, shape index: {}]
  %s6 = sld [smem:[#allocation0]]
  $region54: #{tpu_custom_call.1} parent=0
    _
  %s8 = ssub.s32 1, %s6
  %s9 = scalar_select 0, %s8, %s6
  $region1: #{tpu_custom_call.1} parent=0
    #allocation3 [shape = 'u8[8192]{0}', space=vmem, size = 0x2000, scoped, tag = 'input window, operand 0, single buffered']
    #allocation4 [shape = 's32[1]{0}', space=sflag, size = 0x4, scoped, tag = 'scoped memory for tpu_custom_call.1']
    #allocation5 [shape = 's32[1]{0}', space=sflag, size = 0x4, scoped, tag = 'scoped memory for tpu_custom_call.1']
    #allocation6 [shape = 'u8[65536]{0}', space=vmem, size = 0x10000, scoped, tag = 'input window, operand 1, single buffered']
    #allocation7 [shape = 's32[1]{0}', space=sflag, size = 0x4, scoped, tag = 'scoped memory for tpu_custom_call.1']
    #allocation8 [shape = 'u8[65536]{0}', space=vmem, size = 0x10000, scoped, tag = 'input window, operand 3, single buffered']
    #allocation9 [shape = 'u8[8192]{0}', space=vmem, size = 0x2000, scoped, tag = 'output window, operand 0, single buffered']
    %10 = vsyncpa [#allocation4], 0
    %11 = vsyncpa [#allocation7], 0
    %12 = vsyncpa [#allocation5], 0
    // Predicated region
    $region2: #{tpu_custom_call.1} parent=1 // pred_check
      _
    $region3: #{tpu_custom_call.1} parent=1 // pred_check_branch
      %14 = sbr.rel (0) target = $region5
    $region4: #{tpu_custom_call.1} parent=1 // pred_region
      %16 = vsyncadd [#allocation4], 0
      %s17 = sshll.u32 %s0, 4
      %s18 = int_to_ptr.hbm [resolvable:$true] %s17
      %s19 = sshll.u32 [#allocation3], 4
      %s20 = int_to_ptr.vmem [resolvable:$true] %s19
      %25 = dma.hbm_to_vmem [thread:$0]  %s18, 256, %s20, [#allocation4], 128, 128, 8
    $region5: #{tpu_custom_call.1} parent=1 // pred_fallthru
      _
    // Predicated region
    $region6: #{tpu_custom_call.1} parent=1 // pred_check
      _
    $region7: #{tpu_custom_call.1} parent=1 // pred_check_branch
      %27 = sbr.rel (0) target = $region9
    $region8: #{tpu_custom_call.1} parent=1 // pred_region
      %29 = vsyncadd [#allocation7], 0
      %s30 = sshll.u32 %s1, 4
      %s31 = int_to_ptr.hbm [resolvable:$true] %s30
      %s32 = sshll.u32 [#allocation6], 4
      %s33 = int_to_ptr.vmem [resolvable:$true] %s32
      %38 = dma.hbm_to_vmem [thread:$0]  %s31, 2048, %s33, [#allocation7], 128, 128, 8
    $region9: #{tpu_custom_call.1} parent=1 // pred_fallthru
      _
    // Predicated region
    $region10: #{tpu_custom_call.1} parent=1 // pred_check
      _
    $region11: #{tpu_custom_call.1} parent=1 // pred_check_branch
      %40 = sbr.rel (0) target = $region13
    $region12: #{tpu_custom_call.1} parent=1 // pred_region
      _
    $region13: #{tpu_custom_call.1} parent=1 // pred_fallthru
      _
    // Predicated region
    $region14: #{tpu_custom_call.1} parent=1 // pred_check
      _
    $region15: #{tpu_custom_call.1} parent=1 // pred_check_branch
      %42 = sbr.rel (0) target = $region17
    $region16: #{tpu_custom_call.1} parent=1 // pred_region
      %44 = vsyncadd [#allocation7], 0
      %s45 = sshll.u32 %s3, 4
      %s46 = int_to_ptr.hbm [resolvable:$true] %s45
      %s47 = sshll.u32 [#allocation8], 4
      %s48 = int_to_ptr.vmem [resolvable:$true] %s47
      %53 = dma.hbm_to_vmem [thread:$0]  %s46, 2048, %s48, [#allocation7], 128, 128, 8
    $region17: #{tpu_custom_call.1} parent=1 // pred_fallthru
      _
    // Predicated region
    $region18: #{tpu_custom_call.1} parent=1 // pred_check
      _
    $region19: #{tpu_custom_call.1} parent=1 // pred_check_branch
      %55 = sbr.rel (0) target = $region21
    $region20: #{tpu_custom_call.1} parent=1 // pred_region
      _
    $region21: #{tpu_custom_call.1} parent=1 // pred_fallthru
      _
    // Predicated region
    $region22: #{tpu_custom_call.1} parent=1 // pred_check
      _
    $region23: #{tpu_custom_call.1} parent=1 // pred_check_branch
      %57 = sbr.rel (0) target = $region25
    $region24: #{tpu_custom_call.1} parent=1 // pred_region
      %59 = dma.done [#allocation4], 256
    $region25: #{tpu_custom_call.1} parent=1 // pred_fallthru
      _
    // Predicated region
    $region26: #{tpu_custom_call.1} parent=1 // pred_check
      _
    $region27: #{tpu_custom_call.1} parent=1 // pred_check_branch
      %61 = sbr.rel (0) target = $region29
    $region28: #{tpu_custom_call.1} parent=1 // pred_region
      %63 = dma.done [#allocation7], 2048
    $region29: #{tpu_custom_call.1} parent=1 // pred_fallthru
      _
    // Predicated region
    $region30: #{tpu_custom_call.1} parent=1 // pred_check
      _
    $region31: #{tpu_custom_call.1} parent=1 // pred_check_branch
      %65 = sbr.rel (0) target = $region33
    $region32: #{tpu_custom_call.1} parent=1 // pred_region
      %67 = dma.done [#allocation7], 2048
    $region33: #{tpu_custom_call.1} parent=1 // pred_fallthru
      _
    %v68 = vld [vmem:[#allocation3] sm:$0xff]
    %v69 = vld [vmem:[#allocation3 + $0x8] sm:$0xff]
    %v70 = vld [vmem:[#allocation6] sm:$0xff]
    %v71 = vld [vmem:[#allocation6 + $0x8] sm:$0xff]
    %v72 = vld [vmem:[#allocation6 + $0x10] sm:$0xff]
    %v73 = vld [vmem:[#allocation6 + $0x18] sm:$0xff]
    %v74 = vld [vmem:[#allocation6 + $0x20] sm:$0xff]
    %v75 = vld [vmem:[#allocation6 + $0x28] sm:$0xff]
    %v76 = vld [vmem:[#allocation6 + $0x30] sm:$0xff]
    %v77 = vld [vmem:[#allocation6 + $0x38] sm:$0xff]
    %v78 = vld [vmem:[#allocation6 + $0x40] sm:$0xff]
    %v79 = vld [vmem:[#allocation6 + $0x48] sm:$0xff]
    %v80 = vld [vmem:[#allocation6 + $0x50] sm:$0xff]
    %v81 = vld [vmem:[#allocation6 + $0x58] sm:$0xff]
    %v82 = vld [vmem:[#allocation6 + $0x60] sm:$0xff]
    %v83 = vld [vmem:[#allocation6 + $0x68] sm:$0xff]
    %v84 = vld [vmem:[#allocation6 + $0x70] sm:$0xff]
    %v85 = vld [vmem:[#allocation6 + $0x78] sm:$0xff]
    %v86 = vld [vmem:[%s2] sm:$0x1]
    %v88 = vperm.slane %v86, 0
    %90 = vmatpush.msra.mxu0 %v85
    %91 = vmatpush.msra.mxu0 %v84
    %92 = vmatpush.msra.mxu0 %v83
    %93 = vmatpush.msra.mxu0 %v82
    %94 = vmatpush.msra.mxu0 %v81
    %95 = vmatpush.msra.mxu0 %v80
    %96 = vmatpush.msra.mxu0 %v79
    %97 = vmatpush.msra.mxu0 %v78
    %98 = vmatpush.msra.mxu0 %v77
    %99 = vmatpush.msra.mxu0 %v76
    %100 = vmatpush.msra.mxu0 %v75
    %101 = vmatpush.msra.mxu0 %v74
    %102 = vmatpush.msra.mxu0 %v73
    %103 = vmatpush.msra.mxu0 %v72
    %104 = vmatpush.msra.mxu0 %v71
    %105 = vmatpush.msra.mxu0 %v70
    %106 = vmatmul.f32.gmra.mxu0 %v68
    %v107 = vpop.f32.mrf.mxu0
    %v108 = vadd.f32 %v88, %v107
    %109 = vmatmul.f32.gmra.mxu0 %v69
    %v110 = vpop.f32.mrf.mxu0
    %v111 = vadd.f32 %v88, %v110
    %112 = vdwg.mxu0
    %v113 = vmax.f32 %v108, 0.0
    %v114 = vmax.f32 %v111, 0.0
    %v115 = vld [vmem:[#allocation8] sm:$0xff]
    %v116 = vld [vmem:[#allocation8 + $0x8] sm:$0xff]
    %v117 = vld [vmem:[#allocation8 + $0x10] sm:$0xff]
    %v118 = vld [vmem:[#allocation8 + $0x18] sm:$0xff]
    %v119 = vld [vmem:[#allocation8 + $0x20] sm:$0xff]
    %v120 = vld [vmem:[#allocation8 + $0x28] sm:$0xff]
    %v121 = vld [vmem:[#allocation8 + $0x30] sm:$0xff]
    %v122 = vld [vmem:[#allocation8 + $0x38] sm:$0xff]
    %v123 = vld [vmem:[#allocation8 + $0x40] sm:$0xff]
    %v124 = vld [vmem:[#allocation8 + $0x48] sm:$0xff]
    %v125 = vld [vmem:[#allocation8 + $0x50] sm:$0xff]
    %v126 = vld [vmem:[#allocation8 + $0x58] sm:$0xff]
    %v127 = vld [vmem:[#allocation8 + $0x60] sm:$0xff]
    %v128 = vld [vmem:[#allocation8 + $0x68] sm:$0xff]
    %v129 = vld [vmem:[#allocation8 + $0x70] sm:$0xff]
    %v130 = vld [vmem:[#allocation8 + $0x78] sm:$0xff]
    %131 = vmatpush.msra.mxu0 %v130
    %132 = vmatpush.msra.mxu0 %v129
    %133 = vmatpush.msra.mxu0 %v128
    %134 = vmatpush.msra.mxu0 %v127
    %135 = vmatpush.msra.mxu0 %v126
    %136 = vmatpush.msra.mxu0 %v125
    %137 = vmatpush.msra.mxu0 %v124
    %138 = vmatpush.msra.mxu0 %v123
    %139 = vmatpush.msra.mxu0 %v122
    %140 = vmatpush.msra.mxu0 %v121
    %141 = vmatpush.msra.mxu0 %v120
    %142 = vmatpush.msra.mxu0 %v119
    %143 = vmatpush.msra.mxu0 %v118
    %144 = vmatpush.msra.mxu0 %v117
    %145 = vmatpush.msra.mxu0 %v116
    %146 = vmatpush.msra.mxu0 %v115
    %147 = vmatmul.f32.gmra.mxu0 %v113
    %v148 = vpop.f32.mrf.mxu0
    %v149 = vadd.f32 0.0, %v148
    %150 = vmatmul.f32.gmra.mxu0 %v114
    %v151 = vpop.f32.mrf.mxu0
    %v152 = vadd.f32 0.0, %v151
    %153 = vdwg.mxu0
    %p154 = scmp.eq.s32.totalorder 0, 0
    // Predicated region
    $region34: #{tpu_custom_call.1} parent=1 // pred_check
      %p155 = pneg %p154
    $region35: #{tpu_custom_call.1} parent=1 // pred_check_branch
      %157 = sbr.rel (%p155) target = $region37
    $region36: #{tpu_custom_call.1} parent=1 // pred_region
      %158 = vst [vmem:[#allocation2] sm:$0xff] %v149
      %159 = vst [vmem:[#allocation2 + $0x8] sm:$0xff] %v152
    $region37: #{tpu_custom_call.1} parent=1 // pred_fallthru
      _
    %p160 = scmp.gt.s32.totalorder 0, 0
    // Predicated region
    $region38: #{tpu_custom_call.1} parent=1 // pred_check
      %p161 = pneg %p160
    $region39: #{tpu_custom_call.1} parent=1 // pred_check_branch
      %163 = sbr.rel (%p161) target = $region41
    $region40: #{tpu_custom_call.1} parent=1 // pred_region
      %v164 = vld [vmem:[#allocation2] sm:$0xff]
      %v165 = vld [vmem:[#allocation2 + $0x8] sm:$0xff]
      %v166 = vadd.f32 %v164, %v149
      %v167 = vadd.f32 %v165, %v152
      %168 = vst [vmem:[#allocation2] sm:$0xff] %v166
      %169 = vst [vmem:[#allocation2 + $0x8] sm:$0xff] %v167
    $region41: #{tpu_custom_call.1} parent=1 // pred_fallthru
      _
    // Predicated region
    $region42: #{tpu_custom_call.1} parent=1 // pred_check
      %p170 = pneg %p154
    $region43: #{tpu_custom_call.1} parent=1 // pred_check_branch
      %172 = sbr.rel (%p170) target = $region45
    $region44: #{tpu_custom_call.1} parent=1 // pred_region
      %v173 = vld [vmem:[#allocation2] sm:$0xff]
      %v174 = vld [vmem:[#allocation2 + $0x8] sm:$0xff]
      %v175 = vld [vmem:[%s4] sm:$0x1]
      %v177 = vperm.slane %v175, 0
      %v179 = vadd.f32 %v173, %v177
      %v180 = vadd.f32 %v174, %v177
      %181 = vst [vmem:[#allocation9] sm:$0xff] %v179
      %182 = vst [vmem:[#allocation9 + $0x8] sm:$0xff] %v180
    $region45: #{tpu_custom_call.1} parent=1 // pred_fallthru
      _
    // Predicated region
    $region46: #{tpu_custom_call.1} parent=1 // pred_check
      _
    $region47: #{tpu_custom_call.1} parent=1 // pred_check_branch
      %184 = sbr.rel (0) target = $region49
    $region48: #{tpu_custom_call.1} parent=1 // pred_region
      %186 = vsyncadd [#allocation5], 0
      %s187 = sshll.u32 [#allocation9], 4
      %s188 = int_to_ptr.vmem [resolvable:$true] %s187
      %s189 = sshll.u32 %s5, 4
      %s190 = int_to_ptr.hbm [resolvable:$true] %s189
      %195 = dma.vmem_to_hbm [thread:$0]  %s188, 256, %s190, [#allocation5], 128, 128, 8
    $region49: #{tpu_custom_call.1} parent=1 // pred_fallthru
      _
    // Predicated region
    $region50: #{tpu_custom_call.1} parent=1 // pred_check
      _
    $region51: #{tpu_custom_call.1} parent=1 // pred_check_branch
      %197 = sbr.rel (0) target = $region53
    $region52: #{tpu_custom_call.1} parent=1 // pred_region
      %199 = dma.done [#allocation5], 256
    $region53: #{tpu_custom_call.1} parent=1 // pred_fallthru
      _
    %200 = vsyncpa [#allocation4], 1
    %201 = vsyncpa [#allocation7], 1
    %202 = vsyncpa [#allocation5], 1

</llo_original>
